<compile_context>
chip_gen: v7x
topology: tpu7x:2x2x1
jax: 0.10.0
libtpu: 0.0.40
codegen_flags: <defaults>
</compile_context>

<pallas_src>
import functools

import jax
import jax.numpy as jnp
from jax.experimental import pallas as pl
from jax.experimental.pallas import tpu as pltpu


def dann_kernel(xs_ref, xt_ref, wf_ref, bf_ref, wh_ref, bh_ref, out_ref):
    """One batch tile: shared feature layer + fused label/domain heads.

    xs_ref, xt_ref : (tile, D_in)  bf16   source / target activations
    wf_ref         : (D_in, H)     bf16   feature weights (VMEM-resident)
    bf_ref         : (1, H)        f32    feature bias
    wh_ref         : (H, C+D)      bf16   fused [label | domain] head weights
    bh_ref         : (1, C+D)      f32    fused head bias
    out_ref        : (2, tile, C+D) f32   plane 0 = source, plane 1 = target
    """
    wf = wf_ref[...]
    bf = bf_ref[...]
    wh = wh_ref[...]
    bh = bh_ref[...]

    def branch(x_bf16):
        # bf16 MXU matmul, f32 accumulation; f32 elementwise epilogue.
        feat = jnp.maximum(
            jnp.dot(x_bf16, wf, preferred_element_type=jnp.float32) + bf, 0.0)
        # Gradient reversal is identity in the forward pass.
        return jnp.dot(feat.astype(jnp.bfloat16), wh,
                       preferred_element_type=jnp.float32) + bh

    # The target rows' label-head columns are computed and later sliced away
    # (wasted MXU columns, negligible on a mem-bound kernel).
    out_ref[0, :, :] = branch(xs_ref[...])
    out_ref[1, :, :] = branch(xt_ref[...])


def prepare_dann_params(params):
    """One-time (outside the step function): fuse head weights + bf16 casts."""
    wf, bf, wl, bl, wd, bd = params
    w_heads = jnp.concatenate([wl, wd], axis=1)   # [H, C+D]
    b_heads = jnp.concatenate([bl, bd], axis=1)   # [1, C+D]
    return {
        "wf": wf.astype(jnp.bfloat16),
        "bf": bf.astype(jnp.float32),
        "w_heads": w_heads.astype(jnp.bfloat16),
        "b_heads": b_heads.astype(jnp.float32),
        "n_classes": int(wl.shape[1]),
        "n_domains": int(wd.shape[1]),
    }


def _round_up(x, m):
    return ((x + m - 1) // m) * m


@functools.partial(jax.jit, static_argnames=("tile_rows",))
def _dann_pallas(x_src_bf16, x_tgt_bf16, wf, bf, w_heads, b_heads, *, tile_rows):
    bp, d_in = x_src_bf16.shape
    h = wf.shape[1]
    n_out = w_heads.shape[1]
    tile = min(tile_rows, bp)
    num_tiles = bp // tile

    # Advisory cost hint for XLA's scheduler.
    cost = pl.CostEstimate(
        flops=2 * (2 * bp) * (d_in * h + h * n_out),
        transcendentals=0,
        bytes_accessed=(2 * bp * d_in * 2          # x_src + x_tgt (bf16)
                        + d_in * h * 2 + h * 4     # wf (bf16) + bf (f32)
                        + h * n_out * 2 + n_out * 4
                        + 2 * bp * n_out * 4))     # output (f32)

    weight_spec = lambda shape: pl.BlockSpec(shape, lambda i: (0, 0))

    return pl.pallas_call(
        dann_kernel,
        out_shape=jax.ShapeDtypeStruct((2, bp, n_out), jnp.float32),
        grid=(num_tiles,),
        in_specs=[
            pl.BlockSpec((tile, d_in), lambda i: (i, 0)),     # x_src tile
            pl.BlockSpec((tile, d_in), lambda i: (i, 0)),     # x_tgt tile
            weight_spec(wf.shape),                            # VMEM-resident
            weight_spec(bf.shape),
            weight_spec(w_heads.shape),
            weight_spec(b_heads.shape),
        ],
        out_specs=pl.BlockSpec((2, tile, n_out), lambda i: (0, i, 0)),
        compiler_params=pltpu.CompilerParams(
            dimension_semantics=("parallel",),        # shard batch over v7x's 2 TCs
            vmem_limit_bytes=32 * 1024 * 1024,        # explicit; safe on v5e/v6e/v7x
        ),
        cost_estimate=cost,
    )(x_src_bf16, x_tgt_bf16, wf, bf, w_heads, b_heads)


def dann_forward(x_src, x_tgt, prepared, da_scale=1.0, *, tile_rows=512):
    """Fused DANN forward. Returns (label_src, domain_src, domain_tgt).

    tile_rows: batch tile size. ~512 is near the HBM roofline on v5e/v6e;
    use ~256 on v7x (64 MiB VMEM).
    """
    del da_scale  # identity in the forward pass (affects gradients only)
    b = x_src.shape[0]
    n_classes = prepared["n_classes"]

    # bf16 activations (halves the dominant HBM stream; f32 accumulation in-kernel).
    xs = x_src.astype(jnp.bfloat16)
    xt = x_tgt.astype(jnp.bfloat16)

    # Pad batch to a sublane/tile multiple (no-op when B already divides cleanly).
    bp = _round_up(b, 8)
    tile = min(tile_rows, bp)
    bp = _round_up(bp, tile)
    if bp != b:
        pad = ((0, bp - b), (0, 0))
        xs = jnp.pad(xs, pad)
        xt = jnp.pad(xt, pad)

    out = _dann_pallas(xs, xt, prepared["wf"], prepared["bf"],
                       prepared["w_heads"], prepared["b_heads"],
                       tile_rows=tile_rows)

    out_label = out[0, :b, :n_classes]      # source rows, label columns
    out_dom_src = out[0, :b, n_classes:]    # source rows, domain columns
    out_dom_tgt = out[1, :b, n_classes:]    # target rows, domain columns
    return out_label, out_dom_src, out_dom_tgt


def init_params(key, d_in, hidden, n_classes, n_domains):
    """Deterministic PyTorch-Linear-style init (uniform +/- 1/sqrt(fan_in))."""
    ks = jax.random.split(key, 6)

    def lin(kw, kb, fan_in, fan_out):
        bound = 1.0 / jnp.sqrt(fan_in)
        w = jax.random.uniform(kw, (fan_in, fan_out), jnp.float32, -bound, bound)
        b = jax.random.uniform(kb, (1, fan_out), jnp.float32, -bound, bound)
        return w, b

    wf, bf = lin(ks[0], ks[1], d_in, hidden)
    wl, bl = lin(ks[2], ks[3], hidden, n_classes)
    wd, bd = lin(ks[4], ks[5], hidden, n_domains)
    return wf, bf, wl, bl, wd, bd


def reference_forward_mixed(x_src, x_tgt, params):
    """Plain-JAX reference mirroring the kernel numerics (bf16 ops, f32 acc)."""
    wf, bf, wl, bl, wd, bd = params
    c = lambda a: a.astype(jnp.bfloat16)

    def feats(x):
        f = jnp.dot(c(x), c(wf), preferred_element_type=jnp.float32) + bf
        return jnp.maximum(f, 0.0)

    def head(f, w, b):
        return jnp.dot(c(f), c(w), preferred_element_type=jnp.float32) + b

    fs, ft = feats(x_src), feats(x_tgt)
    return head(fs, wl, bl), head(fs, wd, bd), head(ft, wd, bd)


def reference_forward_f32(x_src, x_tgt, params):
    wf, bf, wl, bl, wd, bd = params
    fs = jnp.maximum(x_src @ wf + bf, 0.0)
    ft = jnp.maximum(x_tgt @ wf + bf, 0.0)
    return fs @ wl + bl, fs @ wd + bd, ft @ wd + bd


if __name__ == "__main__":
    B, D_IN, HIDDEN, N_CLASSES, N_DOMAINS = 8, 32, 64, 4, 2

    key = jax.random.PRNGKey(0)
    k_src, k_tgt, k_params = jax.random.split(key, 3)

    x_src = jax.random.normal(k_src, (B, D_IN), jnp.float32)
    x_tgt = jax.random.normal(k_tgt, (B, D_IN), jnp.float32)
    params = init_params(k_params, D_IN, HIDDEN, N_CLASSES, N_DOMAINS)
    prepared = prepare_dann_params(params)

    out_label, out_dom_src, out_dom_tgt = jax.block_until_ready(
        dann_forward(x_src, x_tgt, prepared, da_scale=1.0))

    # Tight check against a plain-JAX reference with identical mixed precision.
    ref_label, ref_dom_src, ref_dom_tgt = reference_forward_mixed(x_src, x_tgt, params)
    assert jnp.allclose(out_label, ref_label, atol=1e-4, rtol=1e-4)
    assert jnp.allclose(out_dom_src, ref_dom_src, atol=1e-4, rtol=1e-4)
    assert jnp.allclose(out_dom_tgt, ref_dom_tgt, atol=1e-4, rtol=1e-4)

    # Loose sanity check against the full-f32 module math.
    f32_label, f32_dom_src, f32_dom_tgt = reference_forward_f32(x_src, x_tgt, params)
    assert jnp.allclose(out_label, f32_label, atol=5e-2, rtol=5e-2)
    assert jnp.allclose(out_dom_src, f32_dom_src, atol=5e-2, rtol=5e-2)
    assert jnp.allclose(out_dom_tgt, f32_dom_tgt, atol=5e-2, rtol=5e-2)

    print("KERNEL_OK")
</pallas_src>

<mosaic_0001>
module attributes {stable_mosaic.version = 11 : i64} {
  func.func @dann_kernel(%arg0: i32, %arg1: memref<8x32xbf16, #tpu.memory_space<vmem>>, %arg2: memref<8x32xbf16, #tpu.memory_space<vmem>>, %arg3: memref<32x64xbf16, #tpu.memory_space<vmem>>, %arg4: memref<1x64xf32, #tpu.memory_space<vmem>>, %arg5: memref<64x6xbf16, #tpu.memory_space<vmem>>, %arg6: memref<1x6xf32, #tpu.memory_space<vmem>>, %arg7: memref<2x8x6xf32, #tpu.memory_space<vmem>>) attributes {dimension_semantics = [#tpu.dimension_semantics<parallel>], iteration_bounds = array<i64: 1>, scalar_prefetch = 0 : i64, scratch_operands = 0 : i64, tpu.core_type = #tpu.core_type<tc>, window_params = [{transform_indices = @transform_0, window_bounds = array<i64: 8, 32>}, {transform_indices = @transform_1, window_bounds = array<i64: 8, 32>}, {pipeline_mode = #tpu.pipeline_mode<synchronous>, transform_indices = @transform_2, window_bounds = array<i64: 32, 64>}, {pipeline_mode = #tpu.pipeline_mode<synchronous>, transform_indices = @transform_3, window_bounds = array<i64: 1, 64>}, {pipeline_mode = #tpu.pipeline_mode<synchronous>, transform_indices = @transform_4, window_bounds = array<i64: 64, 6>}, {pipeline_mode = #tpu.pipeline_mode<synchronous>, transform_indices = @transform_5, window_bounds = array<i64: 1, 6>}, {transform_indices = @transform_6, window_bounds = array<i64: 2, 8, 6>}]} {
    %c0 = arith.constant 0 : index
    %c0_0 = arith.constant 0 : index
    %0 = vector.load %arg3[%c0, %c0_0] : memref<32x64xbf16, #tpu.memory_space<vmem>>, vector<32x64xbf16>
    %c0_1 = arith.constant 0 : index
    %c0_2 = arith.constant 0 : index
    %1 = vector.load %arg4[%c0_1, %c0_2] : memref<1x64xf32, #tpu.memory_space<vmem>>, vector<1x64xf32>
    %c0_3 = arith.constant 0 : index
    %c0_4 = arith.constant 0 : index
    %2 = vector.load %arg5[%c0_3, %c0_4] : memref<64x6xbf16, #tpu.memory_space<vmem>>, vector<64x6xbf16>
    %c0_5 = arith.constant 0 : index
    %c0_6 = arith.constant 0 : index
    %3 = vector.load %arg6[%c0_5, %c0_6] : memref<1x6xf32, #tpu.memory_space<vmem>>, vector<1x6xf32>
    %c0_7 = arith.constant 0 : index
    %c0_8 = arith.constant 0 : index
    %4 = vector.load %arg1[%c0_7, %c0_8] : memref<8x32xbf16, #tpu.memory_space<vmem>>, vector<8x32xbf16>
    %cst = arith.constant dense<0.000000e+00> : vector<8x64xf32>
    %5 = tpu.matmul %4, %0, %cst {dimension_numbers = #tpu.dot_dimension_numbers<[1], [0], [0], [1], [0, 0, 1, 1], [], []>} : vector<8x32xbf16>, vector<32x64xbf16>, vector<8x64xf32> -> vector<8x64xf32>
    %6 = vector.broadcast %1 : vector<1x64xf32> to vector<8x64xf32>
    %7 = arith.addf %5, %6 : vector<8x64xf32>
    %cst_9 = arith.constant 0.000000e+00 : f32
    %8 = vector.broadcast %cst_9 : f32 to vector<8x64xf32>
    %9 = arith.maximumf %7, %8 : vector<8x64xf32>
    %10 = arith.truncf %9 : vector<8x64xf32> to vector<8x64xbf16>
    %cst_10 = arith.constant dense<0.000000e+00> : vector<8x6xf32>
    %11 = tpu.matmul %10, %2, %cst_10 {dimension_numbers = #tpu.dot_dimension_numbers<[1], [0], [0], [1], [0, 0, 1, 1], [], []>} : vector<8x64xbf16>, vector<64x6xbf16>, vector<8x6xf32> -> vector<8x6xf32>
    %12 = vector.broadcast %3 : vector<1x6xf32> to vector<8x6xf32>
    %13 = arith.addf %11, %12 : vector<8x6xf32>
    %c0_11 = arith.constant 0 : index
    %c0_12 = arith.constant 0 : index
    %c0_13 = arith.constant 0 : index
    %14 = vector.load %arg7[%c0_11, %c0_12, %c0_13] : memref<2x8x6xf32, #tpu.memory_space<vmem>>, vector<1x8x6xf32>
    %15 = vector.shape_cast %14 : vector<1x8x6xf32> to vector<8x6xf32>
    %16 = vector.shape_cast %13 : vector<8x6xf32> to vector<1x8x6xf32>
    tpu.vector_store %arg7[%c0_11, %c0_12, %c0_13], %16 {strides = array<i32>} : memref<2x8x6xf32, #tpu.memory_space<vmem>>, vector<1x8x6xf32>,
    %c0_14 = arith.constant 0 : index
    %c0_15 = arith.constant 0 : index
    %17 = vector.load %arg2[%c0_14, %c0_15] : memref<8x32xbf16, #tpu.memory_space<vmem>>, vector<8x32xbf16>
    %cst_16 = arith.constant dense<0.000000e+00> : vector<8x64xf32>
    %18 = tpu.matmul %17, %0, %cst_16 {dimension_numbers = #tpu.dot_dimension_numbers<[1], [0], [0], [1], [0, 0, 1, 1], [], []>} : vector<8x32xbf16>, vector<32x64xbf16>, vector<8x64xf32> -> vector<8x64xf32>
    %19 = vector.broadcast %1 : vector<1x64xf32> to vector<8x64xf32>
    %20 = arith.addf %18, %19 : vector<8x64xf32>
    %cst_17 = arith.constant 0.000000e+00 : f32
    %21 = vector.broadcast %cst_17 : f32 to vector<8x64xf32>
    %22 = arith.maximumf %20, %21 : vector<8x64xf32>
    %23 = arith.truncf %22 : vector<8x64xf32> to vector<8x64xbf16>
    %cst_18 = arith.constant dense<0.000000e+00> : vector<8x6xf32>
    %24 = tpu.matmul %23, %2, %cst_18 {dimension_numbers = #tpu.dot_dimension_numbers<[1], [0], [0], [1], [0, 0, 1, 1], [], []>} : vector<8x64xbf16>, vector<64x6xbf16>, vector<8x6xf32> -> vector<8x6xf32>
    %25 = vector.broadcast %3 : vector<1x6xf32> to vector<8x6xf32>
    %26 = arith.addf %24, %25 : vector<8x6xf32>
    %c1 = arith.constant 1 : index
    %c0_19 = arith.constant 0 : index
    %c0_20 = arith.constant 0 : index
    %27 = vector.load %arg7[%c1, %c0_19, %c0_20] : memref<2x8x6xf32, #tpu.memory_space<vmem>>, vector<1x8x6xf32>
    %28 = vector.shape_cast %27 : vector<1x8x6xf32> to vector<8x6xf32>
    %29 = vector.shape_cast %26 : vector<8x6xf32> to vector<1x8x6xf32>
    tpu.vector_store %arg7[%c1, %c0_19, %c0_20], %29 {strides = array<i32>} : memref<2x8x6xf32, #tpu.memory_space<vmem>>, vector<1x8x6xf32>,
    return
  }
  func.func @transform_0(%arg0: i32) -> (i32, i32) {
    %c0_i32 = arith.constant 0 : i32
    %c0_i32_0 = arith.constant 0 : i32
    return %arg0, %c0_i32 : i32, i32
  }
  func.func @transform_1(%arg0: i32) -> (i32, i32) {
    %c0_i32 = arith.constant 0 : i32
    %c0_i32_0 = arith.constant 0 : i32
    return %arg0, %c0_i32 : i32, i32
  }
  func.func @transform_2(%arg0: i32) -> (i32, i32) {
    %c0_i32 = arith.constant 0 : i32
    %c0_i32_0 = arith.constant 0 : i32
    %c0_i32_1 = arith.constant 0 : i32
    return %c0_i32, %c0_i32_0 : i32, i32
  }
  func.func @transform_3(%arg0: i32) -> (i32, i32) {
    %c0_i32 = arith.constant 0 : i32
    %c0_i32_0 = arith.constant 0 : i32
    %c0_i32_1 = arith.constant 0 : i32
    return %c0_i32, %c0_i32_0 : i32, i32
  }
  func.func @transform_4(%arg0: i32) -> (i32, i32) {
    %c0_i32 = arith.constant 0 : i32
    %c0_i32_0 = arith.constant 0 : i32
    %c0_i32_1 = arith.constant 0 : i32
    return %c0_i32, %c0_i32_0 : i32, i32
  }
  func.func @transform_5(%arg0: i32) -> (i32, i32) {
    %c0_i32 = arith.constant 0 : i32
    %c0_i32_0 = arith.constant 0 : i32
    %c0_i32_1 = arith.constant 0 : i32
    return %c0_i32, %c0_i32_0 : i32, i32
  }
  func.func @transform_6(%arg0: i32) -> (i32, i32, i32) {
    %c0_i32 = arith.constant 0 : i32
    %c0_i32_0 = arith.constant 0 : i32
    %c0_i32_1 = arith.constant 0 : i32
    return %c0_i32, %arg0, %c0_i32_0 : i32, i32, i32
  }
}

</mosaic_0001>

<llo_original>
// kernel: _dann_pallas.1
$region0: #{_dann_pallas.1}
  #allocation0 [shape = 'u32[]', space=smem, size = 0x4, offset = 0x4, fixed_abs, tag = 'smem constant byte address 0x4 - core index']
  #allocation1 [shape = 'u32[144,128]{1,0:T(1,128)}', space=vmem, size = 0x12000, scoped, tag = 'internal scratch']
  %s0 = inlined_call_operand.vmem [shape: bf16[8,32], index: 0, kind: input, shape index: {}]
  %s1 = inlined_call_operand.vmem [shape: bf16[8,32], index: 1, kind: input, shape index: {}]
  %s2 = inlined_call_operand.vmem [shape: bf16[32,64], index: 2, kind: input, shape index: {}]
  %s3 = inlined_call_operand.vmem [shape: f32[1,64], index: 3, kind: input, shape index: {}]
  %s4 = inlined_call_operand.vmem [shape: bf16[64,6], index: 4, kind: input, shape index: {}]
  %s5 = inlined_call_operand.vmem [shape: f32[1,6], index: 5, kind: input, shape index: {}]
  %s6 = inlined_call_operand.vmem [shape: f32[2,8,6], index: 6, kind: output, shape index: {}]
  %s7 = sld [smem:[#allocation0]]
  $region34: #{_dann_pallas.1} parent=0
    _
  %s9 = ssub.s32 1, %s7
  %s10 = scalar_select 0, %s9, %s7
  // Predicated region
  $region2: #{_dann_pallas.1} parent=0 // pred_check
    _
  $region3: #{_dann_pallas.1} parent=0 // pred_check_branch
    %12 = sbr.rel (0) target = $region5
  $region4: #{_dann_pallas.1} parent=0 // pred_region
    _
  $region5: #{_dann_pallas.1} parent=0 // pred_fallthru
    _
  // Predicated region
  $region6: #{_dann_pallas.1} parent=0 // pred_check
    _
  $region7: #{_dann_pallas.1} parent=0 // pred_check_branch
    %14 = sbr.rel (0) target = $region9
  $region8: #{_dann_pallas.1} parent=0 // pred_region
    _
  $region9: #{_dann_pallas.1} parent=0 // pred_fallthru
    _
  // Predicated region
  $region10: #{_dann_pallas.1} parent=0 // pred_check
    _
  $region11: #{_dann_pallas.1} parent=0 // pred_check_branch
    %16 = sbr.rel (0) target = $region13
  $region12: #{_dann_pallas.1} parent=0 // pred_region
    _
  $region13: #{_dann_pallas.1} parent=0 // pred_fallthru
    _
  // Predicated region
  $region14: #{_dann_pallas.1} parent=0 // pred_check
    _
  $region15: #{_dann_pallas.1} parent=0 // pred_check_branch
    %18 = sbr.rel (0) target = $region17
  $region16: #{_dann_pallas.1} parent=0 // pred_region
    _
  $region17: #{_dann_pallas.1} parent=0 // pred_fallthru
    _
  // Predicated region
  $region18: #{_dann_pallas.1} parent=0 // pred_check
    _
  $region19: #{_dann_pallas.1} parent=0 // pred_check_branch
    %20 = sbr.rel (0) target = $region21
  $region20: #{_dann_pallas.1} parent=0 // pred_region
    _
  $region21: #{_dann_pallas.1} parent=0 // pred_fallthru
    _
  // Predicated region
  $region22: #{_dann_pallas.1} parent=0 // pred_check
    _
  $region23: #{_dann_pallas.1} parent=0 // pred_check_branch
    %22 = sbr.rel (0) target = $region25
  $region24: #{_dann_pallas.1} parent=0 // pred_region
    _
  $region25: #{_dann_pallas.1} parent=0 // pred_fallthru
    _
  %v24 = vld [vmem:[%s2] sm:$0xf]
  %v25 = vld [vmem:[%s2 + $0x4] sm:$0xf]
  %v26 = vld [vmem:[%s2 + $0x8] sm:$0xf]
  %v27 = vld [vmem:[%s2 + $0xc] sm:$0xf]
  %v28 = vld [vmem:[%s3] sm:$0x1]
  %v29 = vld [vmem:[%s4] sm:$0xf]
  %v30 = vld [vmem:[%s4 + $0x4] sm:$0xf]
  %v31 = vld [vmem:[%s4 + $0x8] sm:$0xf]
  %v32 = vld [vmem:[%s4 + $0xc] sm:$0xf]
  %v33 = vld [vmem:[%s4 + $0x10] sm:$0xf]
  %v34 = vld [vmem:[%s4 + $0x14] sm:$0xf]
  %v35 = vld [vmem:[%s4 + $0x18] sm:$0xf]
  %v36 = vld [vmem:[%s4 + $0x1c] sm:$0xf]
  %v37 = vld [vmem:[%s5] sm:$0x1]
  %v38 = vld [vmem:[%s0] sm:$0xf]
  %v40 = vlaneseq
  %v41 = vshrl.u32 %v40, 7
  %v42 = vsub.s32 0, %v41
  %v43 = vrot.slane %v28, %v42
  %v49 = vunpack.c.l.b16 %v24
  %v50 = vunpack.c.l.b16 %v25
  %v51 = vunpack.c.l.b16 %v26
  %v52 = vunpack.c.l.b16 %v27
  %v53 = vpack.c.b16 %v50, %v49
  %v54 = vpack.c.b16 %v52, %v51
  %vm57 = vcmask 261120
  %v59 = vsel %vm57, %v38, 0
  %61 = vmatprep.subr.bf16.mxu0 0
  %62 = vmatpush1.bf16.msra.mxu0 %v53
  %63 = vmatprep.subr.bf16.mxu0 0
  %64 = vmatpush1.bf16.msra.mxu0 %v54
  %65 = vmatprep.subr.bf16.mxu0 0
  %66 = vmatpush1.bf16.msra.mxu0 0
  %67 = vmatprep.subr.bf16.mxu0 0
  %68 = vmatpush1.bf16.msra.mxu0 0
  %69 = vmatprep.subr.bf16.mxu0 0
  %70 = vmatpush1.bf16.msra.mxu0 0
  %71 = vmatprep.subr.bf16.mxu0 0
  %72 = vmatpush1.bf16.msra.mxu0 0
  %73 = vmatprep.subr.bf16.mxu0 0
  %74 = vmatpush1.bf16.msra.mxu0 0
  %75 = vmatprep.subr.bf16.mxu0 0
  %76 = vmatpush1.bf16.msra.mxu0 0
  %77 = vmatprep.subr.bf16.mxu0 0
  %78 = vmatpush1.bf16.msra.mxu0 0
  %79 = vmatprep.subr.bf16.mxu0 0
  %80 = vmatpush1.bf16.msra.mxu0 0
  %81 = vmatprep.subr.bf16.mxu0 0
  %82 = vmatpush1.bf16.msra.mxu0 0
  %83 = vmatprep.subr.bf16.mxu0 0
  %84 = vmatpush1.bf16.msra.mxu0 0
  %85 = vmatprep.subr.bf16.mxu0 0
  %86 = vmatpush1.bf16.msra.mxu0 0
  %87 = vmatprep.subr.bf16.mxu0 0
  %88 = vmatpush1.bf16.msra.mxu0 0
  %89 = vmatprep.subr.bf16.mxu0 0
  %90 = vmatpush1.bf16.msra.mxu0 0
  %91 = vmatprep.subr.bf16.mxu0 0
  %92 = vmatpush1.bf16.msra.mxu0 0
  %93 = vmatprep.mubr.bf16.mxu0 0
  %94 = vmatmul.mubr.bf16.gmra.mrb[0].mxu0 %v59
  %v95 = vpop.f32.mrb[0].mxu0
  %v96 = vadd.f32 %v43, %v95
  %v97 = vpop.f32.mrb[0].mxu0
  %v98 = vpop.f32.mrb[0].mxu0
  %v99 = vpop.f32.mrb[0].mxu0
  %100 = vdwg.mxu0
  %v101 = vmax.f32 %v96, 0.0
  %v102 = vpack.c.bf16 %v101, %v101
  %v104 = vlaneseq
  %v105 = vshrl.u32 %v104, 7
  %v106 = vsub.s32 0, %v105
  %v107 = vrot.slane %v37, %v106
  %v117 = vunpack.c.l.b16 %v29
  %v118 = vunpack.c.l.b16 %v30
  %v119 = vunpack.c.l.b16 %v31
  %v120 = vunpack.c.l.b16 %v32
  %v121 = vunpack.c.l.b16 %v33
  %v122 = vunpack.c.l.b16 %v34
  %v123 = vunpack.c.l.b16 %v35
  %v124 = vunpack.c.l.b16 %v36
  %v125 = vpack.c.b16 %v118, %v117
  %v126 = vpack.c.b16 %v120, %v119
  %v127 = vpack.c.b16 %v122, %v121
  %v128 = vpack.c.b16 %v124, %v123
  %vm133 = vcmask 523264
  %v135 = vsel %vm133, %v102, 0
  %137 = vmatprep.subr.bf16.mxu0 0
  %138 = vmatpush1.bf16.msra.mxu0 %v125
  %139 = vmatprep.subr.bf16.mxu0 0
  %140 = vmatpush1.bf16.msra.mxu0 %v126
  %141 = vmatprep.subr.bf16.mxu0 0
  %142 = vmatpush1.bf16.msra.mxu0 %v127
  %143 = vmatprep.subr.bf16.mxu0 0
  %144 = vmatpush1.bf16.msra.mxu0 %v128
  %145 = vmatprep.subr.bf16.mxu0 0
  %146 = vmatpush1.bf16.msra.mxu0 0
  %147 = vmatprep.subr.bf16.mxu0 0
  %148 = vmatpush1.bf16.msra.mxu0 0
  %149 = vmatprep.subr.bf16.mxu0 0
  %150 = vmatpush1.bf16.msra.mxu0 0
  %151 = vmatprep.subr.bf16.mxu0 0
  %152 = vmatpush1.bf16.msra.mxu0 0
  %153 = vmatprep.subr.bf16.mxu0 0
  %154 = vmatpush1.bf16.msra.mxu0 0
  %155 = vmatprep.subr.bf16.mxu0 0
  %156 = vmatpush1.bf16.msra.mxu0 0
  %157 = vmatprep.subr.bf16.mxu0 0
  %158 = vmatpush1.bf16.msra.mxu0 0
  %159 = vmatprep.subr.bf16.mxu0 0
  %160 = vmatpush1.bf16.msra.mxu0 0
  %161 = vmatprep.subr.bf16.mxu0 0
  %162 = vmatpush1.bf16.msra.mxu0 0
  %163 = vmatprep.subr.bf16.mxu0 0
  %164 = vmatpush1.bf16.msra.mxu0 0
  %165 = vmatprep.subr.bf16.mxu0 0
  %166 = vmatpush1.bf16.msra.mxu0 0
  %167 = vmatprep.subr.bf16.mxu0 0
  %168 = vmatpush1.bf16.msra.mxu0 0
  %169 = vmatprep.mubr.bf16.mxu0 0
  %170 = vmatmul.mubr.bf16.gmra.mrb[0].mxu0 %v135
  %v171 = vpop.f32.mrb[0].mxu0
  %v172 = vadd.f32 %v107, %v171
  %v173 = vpop.f32.mrb[0].mxu0
  %v174 = vpop.f32.mrb[0].mxu0
  %v175 = vpop.f32.mrb[0].mxu0
  %176 = vdwg.mxu0
  %vm177 = vcmask 48128
  %178 = vst.msk [vmem:[%s6] sm:$0xff] %vm177, %v172
  %v179 = vld [vmem:[%s1] sm:$0xf]
  %v181 = vsel %vm57, %v179, 0
  %183 = vmatprep.subr.bf16.mxu0 0
  %184 = vmatpush1.bf16.msra.mxu0 %v53
  %185 = vmatprep.subr.bf16.mxu0 0
  %186 = vmatpush1.bf16.msra.mxu0 %v54
  %187 = vmatprep.subr.bf16.mxu0 0
  %188 = vmatpush1.bf16.msra.mxu0 0
  %189 = vmatprep.subr.bf16.mxu0 0
  %190 = vmatpush1.bf16.msra.mxu0 0
  %191 = vmatprep.subr.bf16.mxu0 0
  %192 = vmatpush1.bf16.msra.mxu0 0
  %193 = vmatprep.subr.bf16.mxu0 0
  %194 = vmatpush1.bf16.msra.mxu0 0
  %195 = vmatprep.subr.bf16.mxu0 0
  %196 = vmatpush1.bf16.msra.mxu0 0
  %197 = vmatprep.subr.bf16.mxu0 0
  %198 = vmatpush1.bf16.msra.mxu0 0
  %199 = vmatprep.subr.bf16.mxu0 0
  %200 = vmatpush1.bf16.msra.mxu0 0
  %201 = vmatprep.subr.bf16.mxu0 0
  %202 = vmatpush1.bf16.msra.mxu0 0
  %203 = vmatprep.subr.bf16.mxu0 0
  %204 = vmatpush1.bf16.msra.mxu0 0
  %205 = vmatprep.subr.bf16.mxu0 0
  %206 = vmatpush1.bf16.msra.mxu0 0
  %207 = vmatprep.subr.bf16.mxu0 0
  %208 = vmatpush1.bf16.msra.mxu0 0
  %209 = vmatprep.subr.bf16.mxu0 0
  %210 = vmatpush1.bf16.msra.mxu0 0
  %211 = vmatprep.subr.bf16.mxu0 0
  %212 = vmatpush1.bf16.msra.mxu0 0
  %213 = vmatprep.subr.bf16.mxu0 0
  %214 = vmatpush1.bf16.msra.mxu0 0
  %215 = vmatprep.mubr.bf16.mxu0 0
  %216 = vmatmul.mubr.bf16.gmra.mrb[0].mxu0 %v181
  %v217 = vpop.f32.mrb[0].mxu0
  %v218 = vadd.f32 %v43, %v217
  %v219 = vpop.f32.mrb[0].mxu0
  %v220 = vpop.f32.mrb[0].mxu0
  %v221 = vpop.f32.mrb[0].mxu0
  %222 = vdwg.mxu0
  %v223 = vmax.f32 %v218, 0.0
  %v224 = vpack.c.bf16 %v223, %v223
  %v226 = vsel %vm133, %v224, 0
  %228 = vmatprep.subr.bf16.mxu0 0
  %229 = vmatpush1.bf16.msra.mxu0 %v125
  %230 = vmatprep.subr.bf16.mxu0 0
  %231 = vmatpush1.bf16.msra.mxu0 %v126
  %232 = vmatprep.subr.bf16.mxu0 0
  %233 = vmatpush1.bf16.msra.mxu0 %v127
  %234 = vmatprep.subr.bf16.mxu0 0
  %235 = vmatpush1.bf16.msra.mxu0 %v128
  %236 = vmatprep.subr.bf16.mxu0 0
  %237 = vmatpush1.bf16.msra.mxu0 0
  %238 = vmatprep.subr.bf16.mxu0 0
  %239 = vmatpush1.bf16.msra.mxu0 0
  %240 = vmatprep.subr.bf16.mxu0 0
  %241 = vmatpush1.bf16.msra.mxu0 0
  %242 = vmatprep.subr.bf16.mxu0 0
  %243 = vmatpush1.bf16.msra.mxu0 0
  %244 = vmatprep.subr.bf16.mxu0 0
  %245 = vmatpush1.bf16.msra.mxu0 0
  %246 = vmatprep.subr.bf16.mxu0 0
  %247 = vmatpush1.bf16.msra.mxu0 0
  %248 = vmatprep.subr.bf16.mxu0 0
  %249 = vmatpush1.bf16.msra.mxu0 0
  %250 = vmatprep.subr.bf16.mxu0 0
  %251 = vmatpush1.bf16.msra.mxu0 0
  %252 = vmatprep.subr.bf16.mxu0 0
  %253 = vmatpush1.bf16.msra.mxu0 0
  %254 = vmatprep.subr.bf16.mxu0 0
  %255 = vmatpush1.bf16.msra.mxu0 0
  %256 = vmatprep.subr.bf16.mxu0 0
  %257 = vmatpush1.bf16.msra.mxu0 0
  %258 = vmatprep.subr.bf16.mxu0 0
  %259 = vmatpush1.bf16.msra.mxu0 0
  %260 = vmatprep.mubr.bf16.mxu0 0
  %261 = vmatmul.mubr.bf16.gmra.mrb[0].mxu0 %v226
  %v262 = vpop.f32.mrb[0].mxu0
  %v263 = vadd.f32 %v107, %v262
  %v264 = vpop.f32.mrb[0].mxu0
  %v265 = vpop.f32.mrb[0].mxu0
  %v266 = vpop.f32.mrb[0].mxu0
  %267 = vdwg.mxu0
  %s268 = scalar_lea.vmem %s6, 8
  %269 = vst.msk [vmem:[%s268] sm:$0xff] %vm177, %v263
  // Predicated region
  $region26: #{_dann_pallas.1} parent=0 // pred_check
    _
  $region27: #{_dann_pallas.1} parent=0 // pred_check_branch
    %271 = sbr.rel (0) target = $region29
  $region28: #{_dann_pallas.1} parent=0 // pred_region
    _
  $region29: #{_dann_pallas.1} parent=0 // pred_fallthru
    _
  // Predicated region
  $region30: #{_dann_pallas.1} parent=0 // pred_check
    _
  $region31: #{_dann_pallas.1} parent=0 // pred_check_branch
    %273 = sbr.rel (0) target = $region33
  $region32: #{_dann_pallas.1} parent=0 // pred_region
    _
  $region33: #{_dann_pallas.1} parent=0 // pred_fallthru
    _

</llo_original>
